<compile_context>
chip_gen: v7x
topology: tpu7x:2x2x1
jax: 0.10.0
libtpu: 0.0.40
codegen_flags: <defaults>
</compile_context>

<pallas_src>
import functools

import jax
import jax.numpy as jnp
import numpy as np
from jax.experimental import pallas as pl
from jax.experimental.pallas import tpu as pltpu

EPS = 1e-6
NEG_SLOPE = 0.01  # both nn.LeakyReLU() and VNLeakyReLU default


def _round_up(x, m):
    return (x + m - 1) // m * m


def _gb_perceptron_kernel(
    sca_ref,      # (S_in, tm)
    vec_ref,      # (3, V_in, tm)
    wv1_ref,      # (H, V_in)        lin_vector   (bias=False)
    wv2_ref,      # (O_vec, H)       lin_vector2  (bias=False)
    ws1_ref,      # (S_hid, S_in)    lin_scalar_1 (bias=False)
    ws2v_ref,     # (S_out, H)       lin_scalar_2 weight, vector-norm half
    ws2s_ref,     # (S_out, S_hid)   lin_scalar_2 weight, scalar half
    wg_ref,       # (O_vec, S_out)   scalar_to_vector_gates weight
    bg_ref,       # (O_vec, 1)       scalar_to_vector_gates bias
    wd_ref,       # (O_vec, O_vec)   VNLeakyReLU map_to_dir (bias=False)
    out_sca_ref,  # (S_out, tm)
    out_vec_ref,  # (3, O_vec, tm)
):
    wv1 = wv1_ref[...]
    wv2 = wv2_ref[...]
    ws1 = ws1_ref[...]
    ws2v = ws2v_ref[...]
    ws2s = ws2s_ref[...]
    wg = wg_ref[...]
    bg = bg_ref[...]
    wd = wd_ref[...]

    sca = sca_ref[...]

    # --- GBLinear: VNLinear #1, per xyz component (static leading-dim slices) ---
    vi0 = jnp.dot(wv1, vec_ref[0], preferred_element_type=jnp.float32)  # (H, tm)
    vi1 = jnp.dot(wv1, vec_ref[1], preferred_element_type=jnp.float32)
    vi2 = jnp.dot(wv1, vec_ref[2], preferred_element_type=jnp.float32)

    # norm over xyz components (== torch.norm(..., dim=-1) in the PyTorch layout)
    vec_norm = jnp.sqrt(vi0 * vi0 + vi1 * vi1 + vi2 * vi2)              # (H, tm)

    # --- scalar path (concat replaced by split weight: two matmuls summed) ---
    z_sca = jnp.dot(ws1, sca, preferred_element_type=jnp.float32)       # (S_hid, tm)
    out_sca = (jnp.dot(ws2v, vec_norm, preferred_element_type=jnp.float32)
               + jnp.dot(ws2s, z_sca, preferred_element_type=jnp.float32))  # (S_out, tm)

    # --- gating + VNLinear #2 ---
    gates = jax.nn.sigmoid(
        jnp.dot(wg, out_sca, preferred_element_type=jnp.float32) + bg)  # (O_vec, tm)
    ov0 = jnp.dot(wv2, vi0, preferred_element_type=jnp.float32) * gates
    ov1 = jnp.dot(wv2, vi1, preferred_element_type=jnp.float32) * gates
    ov2 = jnp.dot(wv2, vi2, preferred_element_type=jnp.float32) * gates

    # --- VNLeakyReLU on vectors (algebraically simplified blend) ---
    d0 = jnp.dot(wd, ov0, preferred_element_type=jnp.float32)
    d1 = jnp.dot(wd, ov1, preferred_element_type=jnp.float32)
    d2 = jnp.dot(wd, ov2, preferred_element_type=jnp.float32)
    dotprod = ov0 * d0 + ov1 * d1 + ov2 * d2                            # (O_vec, tm)
    d_norm_sq = d0 * d0 + d1 * d1 + d2 * d2
    # x_out = x - (1-ns)*(1-mask)*dot/(|d|^2+eps)*d   (identical to the reference form)
    coeff = jnp.where(
        dotprod >= 0.0,
        0.0,
        (1.0 - NEG_SLOPE) * dotprod * pl.reciprocal(d_norm_sq + EPS, approx=False),
    )
    out_vec_ref[0] = (ov0 - coeff * d0).astype(out_vec_ref.dtype)
    out_vec_ref[1] = (ov1 - coeff * d1).astype(out_vec_ref.dtype)
    out_vec_ref[2] = (ov2 - coeff * d2).astype(out_vec_ref.dtype)

    # --- LeakyReLU on scalars ---
    out_sca_ref[...] = jnp.where(
        out_sca >= 0.0, out_sca, NEG_SLOPE * out_sca).astype(out_sca_ref.dtype)


def gb_perceptron_vn(sca, vec, params, *, tm=1024):
    """sca: [B, N, S_in], vec: [B, N, V_in, 3] (PyTorch convention)."""
    B, N, s_in = sca.shape
    _, _, v_in, _ = vec.shape
    M = B * N

    wv1, wv2, ws1, ws2, wg, bg, wd = (
        params["wv1"], params["wv2"], params["ws1"], params["ws2"],
        params["wg"], params["bg"], params["wd"],
    )
    hid = wv1.shape[0]
    s_hid = ws1.shape[0]
    s_out = ws2.shape[0]
    o_vec = wv2.shape[0]

    # split lin_scalar_2 so the kernel needs no lane-axis concat
    ws2_v = ws2[:, :hid]
    ws2_s = ws2[:, hid:]
    bg2d = bg.reshape(o_vec, 1)

    # convert to kernel layout: points on the lane (last) axis
    sca_t = sca.reshape(M, s_in).T                                  # (S_in, M)
    vec_t = jnp.transpose(vec.reshape(M, v_in, 3), (2, 1, 0))       # (3, V_in, M)

    # pad M up to a lane-aligned multiple of the row tile (padding is zeros -> outputs 0)
    M_pad = _round_up(M, 128)
    tm = min(tm, M_pad)
    M_pad = _round_up(M_pad, tm)
    if M_pad != M:
        sca_t = jnp.pad(sca_t, ((0, 0), (0, M_pad - M)))
        vec_t = jnp.pad(vec_t, ((0, 0), (0, 0), (0, M_pad - M)))

    grid = (M_pad // tm,)
    full2 = lambda i: (0, 0)

    out_sca_t, out_vec_t = pl.pallas_call(
        _gb_perceptron_kernel,
        out_shape=(
            jax.ShapeDtypeStruct((s_out, M_pad), jnp.float32),
            jax.ShapeDtypeStruct((3, o_vec, M_pad), jnp.float32),
        ),
        grid_spec=pltpu.PrefetchScalarGridSpec(
            num_scalar_prefetch=0,
            grid=grid,
            in_specs=[
                pl.BlockSpec((s_in, tm), lambda i: (0, i)),
                pl.BlockSpec((3, v_in, tm), lambda i: (0, 0, i)),
                pl.BlockSpec((hid, v_in), full2),
                pl.BlockSpec((o_vec, hid), full2),
                pl.BlockSpec((s_hid, s_in), full2),
                pl.BlockSpec((s_out, hid), full2),
                pl.BlockSpec((s_out, s_hid), full2),
                pl.BlockSpec((o_vec, s_out), full2),
                pl.BlockSpec((o_vec, 1), full2),
                pl.BlockSpec((o_vec, o_vec), full2),
            ],
            out_specs=[
                pl.BlockSpec((s_out, tm), lambda i: (0, i)),
                pl.BlockSpec((3, o_vec, tm), lambda i: (0, 0, i)),
            ],
        ),
        compiler_params=pltpu.CompilerParams(
            dimension_semantics=("parallel",),
        ),
    )(sca_t, vec_t, wv1, wv2, ws1, ws2_v, ws2_s, wg, bg2d, wd)

    # back to the PyTorch convention
    out_sca = out_sca_t[:, :M].T.reshape(B, N, s_out)
    out_vec = jnp.transpose(out_vec_t[:, :, :M], (2, 1, 0)).reshape(B, N, o_vec, 3)
    return out_sca, out_vec


def ref_forward(sca, vec, params):
    """Pure-JAX reference mirroring the PyTorch module exactly."""
    wv1, wv2, ws1, ws2, wg, bg, wd = (
        params["wv1"], params["wv2"], params["ws1"], params["ws2"],
        params["wg"], params["bg"], params["wd"],
    )
    vi = jnp.einsum("bnvc,hv->bnhc", vec, wv1)                 # VNLinear #1
    vnorm = jnp.sqrt(jnp.sum(vi * vi, axis=-1))                # norm over xyz
    z = sca @ ws1.T
    cat = jnp.concatenate([vnorm, z], axis=-1)
    out_sca = cat @ ws2.T
    gates = jax.nn.sigmoid(out_sca @ wg.T + bg)[..., None]
    ov = jnp.einsum("bnhc,oh->bnoc", vi, wv2) * gates          # VNLinear #2 + gate
    d = jnp.einsum("bnoc,po->bnpc", ov, wd)                    # VNLeakyReLU
    dot = jnp.sum(ov * d, axis=-1, keepdims=True)
    mask = (dot >= 0).astype(ov.dtype)
    dns = jnp.sum(d * d, axis=-1, keepdims=True)
    vec_out = NEG_SLOPE * ov + (1 - NEG_SLOPE) * (
        mask * ov + (1 - mask) * (ov - dot / (dns + EPS) * d)
    )
    sca_out = jnp.where(out_sca >= 0, out_sca, NEG_SLOPE * out_sca)
    return sca_out, vec_out


def init_params(key, in_scalar, in_vector, out_scalar, out_vector):
    # bottleneck = 1  ->  hidden_dim = sca_hidden_dim = max(in_vector, out_vector)
    hidden = max(in_vector, out_vector)
    sca_hidden = max(in_vector, out_vector)
    ks = jax.random.split(key, 7)
    scale = 0.1
    return {
        "wv1": scale * jax.random.normal(ks[0], (hidden, in_vector), jnp.float32),
        "wv2": scale * jax.random.normal(ks[1], (out_vector, hidden), jnp.float32),
        "ws1": scale * jax.random.normal(ks[2], (sca_hidden, in_scalar), jnp.float32),
        "ws2": scale * jax.random.normal(ks[3], (out_scalar, hidden + sca_hidden), jnp.float32),
        "wg": scale * jax.random.normal(ks[4], (out_vector, out_scalar), jnp.float32),
        "bg": scale * jax.random.normal(ks[5], (out_vector,), jnp.float32),
        "wd": scale * jax.random.normal(ks[6], (out_vector, out_vector), jnp.float32),
    }


def _run_case(key, B, N, in_scalar, in_vector, out_scalar, out_vector, tm):
    k_sca, k_vec, k_par = jax.random.split(key, 3)
    sca = jax.random.normal(k_sca, (B, N, in_scalar), jnp.float32)
    vec = jax.random.normal(k_vec, (B, N, in_vector, 3), jnp.float32)
    params = init_params(k_par, in_scalar, in_vector, out_scalar, out_vector)

    fn = jax.jit(functools.partial(gb_perceptron_vn, params=params, tm=tm))
    out_sca, out_vec = fn(sca, vec)
    out_sca = jax.block_until_ready(out_sca)
    out_vec = jax.block_until_ready(out_vec)

    ref_sca, ref_vec = ref_forward(sca, vec, params)
    np.testing.assert_allclose(np.asarray(out_sca), np.asarray(ref_sca), rtol=1e-5, atol=1e-5)
    np.testing.assert_allclose(np.asarray(out_vec), np.asarray(ref_vec), rtol=1e-5, atol=1e-5)


if __name__ == "__main__":
    key = jax.random.PRNGKey(0)
    k1, k2 = jax.random.split(key)

    # small canonical case (single block, M padded 16 -> 128)
    _run_case(k1, B=2, N=8, in_scalar=16, in_vector=8, out_scalar=16, out_vector=8, tm=1024)

    # ragged / multi-block case (M=272 -> padded 384, grid of 3) exercises tiling + padding
    _run_case(k2, B=2, N=136, in_scalar=16, in_vector=8, out_scalar=16, out_vector=8, tm=128)

    print("KERNEL_OK")
</pallas_src>

<mosaic_0001>
module attributes {stable_mosaic.version = 11 : i64} {
  func.func @_gb_perceptron_kernel(%arg0: i32, %arg1: memref<16x128xf32, #tpu.memory_space<vmem>>, %arg2: memref<3x8x128xf32, #tpu.memory_space<vmem>>, %arg3: memref<8x8xf32, #tpu.memory_space<vmem>>, %arg4: memref<8x8xf32, #tpu.memory_space<vmem>>, %arg5: memref<8x16xf32, #tpu.memory_space<vmem>>, %arg6: memref<16x8xf32, #tpu.memory_space<vmem>>, %arg7: memref<16x8xf32, #tpu.memory_space<vmem>>, %arg8: memref<8x16xf32, #tpu.memory_space<vmem>>, %arg9: memref<8x1xf32, #tpu.memory_space<vmem>>, %arg10: memref<8x8xf32, #tpu.memory_space<vmem>>, %arg11: memref<16x128xf32, #tpu.memory_space<vmem>>, %arg12: memref<3x8x128xf32, #tpu.memory_space<vmem>>) attributes {dimension_semantics = [#tpu.dimension_semantics<parallel>], iteration_bounds = array<i64: 1>, scalar_prefetch = 0 : i64, scratch_operands = 0 : i64, tpu.core_type = #tpu.core_type<tc>, window_params = [{transform_indices = @transform_0, window_bounds = array<i64: 16, 128>}, {transform_indices = @transform_1, window_bounds = array<i64: 3, 8, 128>}, {pipeline_mode = #tpu.pipeline_mode<synchronous>, transform_indices = @transform_2, window_bounds = array<i64: 8, 8>}, {pipeline_mode = #tpu.pipeline_mode<synchronous>, transform_indices = @transform_3, window_bounds = array<i64: 8, 8>}, {pipeline_mode = #tpu.pipeline_mode<synchronous>, transform_indices = @transform_4, window_bounds = array<i64: 8, 16>}, {pipeline_mode = #tpu.pipeline_mode<synchronous>, transform_indices = @transform_5, window_bounds = array<i64: 16, 8>}, {pipeline_mode = #tpu.pipeline_mode<synchronous>, transform_indices = @transform_6, window_bounds = array<i64: 16, 8>}, {pipeline_mode = #tpu.pipeline_mode<synchronous>, transform_indices = @transform_7, window_bounds = array<i64: 8, 16>}, {pipeline_mode = #tpu.pipeline_mode<synchronous>, transform_indices = @transform_8, window_bounds = array<i64: 8, 1>}, {pipeline_mode = #tpu.pipeline_mode<synchronous>, transform_indices = @transform_9, window_bounds = array<i64: 8, 8>}, {transform_indices = @transform_10, window_bounds = array<i64: 16, 128>}, {transform_indices = @transform_11, window_bounds = array<i64: 3, 8, 128>}]} {
    %c0 = arith.constant 0 : index
    %c0_0 = arith.constant 0 : index
    %0 = vector.load %arg3[%c0, %c0_0] : memref<8x8xf32, #tpu.memory_space<vmem>>, vector<8x8xf32>
    %c0_1 = arith.constant 0 : index
    %c0_2 = arith.constant 0 : index
    %1 = vector.load %arg4[%c0_1, %c0_2] : memref<8x8xf32, #tpu.memory_space<vmem>>, vector<8x8xf32>
    %c0_3 = arith.constant 0 : index
    %c0_4 = arith.constant 0 : index
    %2 = vector.load %arg5[%c0_3, %c0_4] : memref<8x16xf32, #tpu.memory_space<vmem>>, vector<8x16xf32>
    %c0_5 = arith.constant 0 : index
    %c0_6 = arith.constant 0 : index
    %3 = vector.load %arg6[%c0_5, %c0_6] : memref<16x8xf32, #tpu.memory_space<vmem>>, vector<16x8xf32>
    %c0_7 = arith.constant 0 : index
    %c0_8 = arith.constant 0 : index
    %4 = vector.load %arg7[%c0_7, %c0_8] : memref<16x8xf32, #tpu.memory_space<vmem>>, vector<16x8xf32>
    %c0_9 = arith.constant 0 : index
    %c0_10 = arith.constant 0 : index
    %5 = vector.load %arg8[%c0_9, %c0_10] : memref<8x16xf32, #tpu.memory_space<vmem>>, vector<8x16xf32>
    %c0_11 = arith.constant 0 : index
    %c0_12 = arith.constant 0 : index
    %6 = vector.load %arg9[%c0_11, %c0_12] : memref<8x1xf32, #tpu.memory_space<vmem>>, vector<8x1xf32>
    %c0_13 = arith.constant 0 : index
    %c0_14 = arith.constant 0 : index
    %7 = vector.load %arg10[%c0_13, %c0_14] : memref<8x8xf32, #tpu.memory_space<vmem>>, vector<8x8xf32>
    %c0_15 = arith.constant 0 : index
    %c0_16 = arith.constant 0 : index
    %8 = vector.load %arg1[%c0_15, %c0_16] : memref<16x128xf32, #tpu.memory_space<vmem>>, vector<16x128xf32>
    %c0_17 = arith.constant 0 : index
    %c0_18 = arith.constant 0 : index
    %c0_19 = arith.constant 0 : index
    %9 = vector.load %arg2[%c0_17, %c0_18, %c0_19] : memref<3x8x128xf32, #tpu.memory_space<vmem>>, vector<1x8x128xf32>
    %10 = vector.shape_cast %9 : vector<1x8x128xf32> to vector<8x128xf32>
    %cst = arith.constant dense<0.000000e+00> : vector<8x128xf32>
    %11 = tpu.matmul %0, %10, %cst {dimension_numbers = #tpu.dot_dimension_numbers<[1], [0], [0], [1], [0, 0, 1, 1], [], []>} : vector<8x8xf32>, vector<8x128xf32>, vector<8x128xf32> -> vector<8x128xf32>
    %c1 = arith.constant 1 : index
    %c0_20 = arith.constant 0 : index
    %c0_21 = arith.constant 0 : index
    %12 = vector.load %arg2[%c1, %c0_20, %c0_21] : memref<3x8x128xf32, #tpu.memory_space<vmem>>, vector<1x8x128xf32>
    %13 = vector.shape_cast %12 : vector<1x8x128xf32> to vector<8x128xf32>
    %cst_22 = arith.constant dense<0.000000e+00> : vector<8x128xf32>
    %14 = tpu.matmul %0, %13, %cst_22 {dimension_numbers = #tpu.dot_dimension_numbers<[1], [0], [0], [1], [0, 0, 1, 1], [], []>} : vector<8x8xf32>, vector<8x128xf32>, vector<8x128xf32> -> vector<8x128xf32>
    %c2 = arith.constant 2 : index
    %c0_23 = arith.constant 0 : index
    %c0_24 = arith.constant 0 : index
    %15 = vector.load %arg2[%c2, %c0_23, %c0_24] : memref<3x8x128xf32, #tpu.memory_space<vmem>>, vector<1x8x128xf32>
    %16 = vector.shape_cast %15 : vector<1x8x128xf32> to vector<8x128xf32>
    %cst_25 = arith.constant dense<0.000000e+00> : vector<8x128xf32>
    %17 = tpu.matmul %0, %16, %cst_25 {dimension_numbers = #tpu.dot_dimension_numbers<[1], [0], [0], [1], [0, 0, 1, 1], [], []>} : vector<8x8xf32>, vector<8x128xf32>, vector<8x128xf32> -> vector<8x128xf32>
    %18 = arith.mulf %11, %11 : vector<8x128xf32>
    %19 = arith.mulf %14, %14 : vector<8x128xf32>
    %20 = arith.addf %18, %19 : vector<8x128xf32>
    %21 = arith.mulf %17, %17 : vector<8x128xf32>
    %22 = arith.addf %20, %21 : vector<8x128xf32>
    %23 = math.sqrt %22 : vector<8x128xf32>
    %cst_26 = arith.constant dense<0.000000e+00> : vector<8x128xf32>
    %24 = tpu.matmul %2, %8, %cst_26 {dimension_numbers = #tpu.dot_dimension_numbers<[1], [0], [0], [1], [0, 0, 1, 1], [], []>} : vector<8x16xf32>, vector<16x128xf32>, vector<8x128xf32> -> vector<8x128xf32>
    %cst_27 = arith.constant dense<0.000000e+00> : vector<16x128xf32>
    %25 = tpu.matmul %3, %23, %cst_27 {dimension_numbers = #tpu.dot_dimension_numbers<[1], [0], [0], [1], [0, 0, 1, 1], [], []>} : vector<16x8xf32>, vector<8x128xf32>, vector<16x128xf32> -> vector<16x128xf32>
    %cst_28 = arith.constant dense<0.000000e+00> : vector<16x128xf32>
    %26 = tpu.matmul %4, %24, %cst_28 {dimension_numbers = #tpu.dot_dimension_numbers<[1], [0], [0], [1], [0, 0, 1, 1], [], []>} : vector<16x8xf32>, vector<8x128xf32>, vector<16x128xf32> -> vector<16x128xf32>
    %27 = arith.addf %25, %26 : vector<16x128xf32>
    %cst_29 = arith.constant dense<0.000000e+00> : vector<8x128xf32>
    %28 = tpu.matmul %5, %27, %cst_29 {dimension_numbers = #tpu.dot_dimension_numbers<[1], [0], [0], [1], [0, 0, 1, 1], [], []>} : vector<8x16xf32>, vector<16x128xf32>, vector<8x128xf32> -> vector<8x128xf32>
    %29 = vector.broadcast %6 : vector<8x1xf32> to vector<8x128xf32>
    %30 = arith.addf %28, %29 : vector<8x128xf32>
    %31 = arith.negf %30 : vector<8x128xf32>
    %32 = math.exp %31 : vector<8x128xf32>
    %cst_30 = arith.constant 1.000000e+00 : f32
    %33 = vector.broadcast %cst_30 : f32 to vector<8x128xf32>
    %34 = arith.addf %33, %32 : vector<8x128xf32>
    %35 = arith.divf %33, %34 : vector<8x128xf32>
    %cst_31 = arith.constant dense<0.000000e+00> : vector<8x128xf32>
    %36 = tpu.matmul %1, %11, %cst_31 {dimension_numbers = #tpu.dot_dimension_numbers<[1], [0], [0], [1], [0, 0, 1, 1], [], []>} : vector<8x8xf32>, vector<8x128xf32>, vector<8x128xf32> -> vector<8x128xf32>
    %37 = arith.mulf %36, %35 : vector<8x128xf32>
    %cst_32 = arith.constant dense<0.000000e+00> : vector<8x128xf32>
    %38 = tpu.matmul %1, %14, %cst_32 {dimension_numbers = #tpu.dot_dimension_numbers<[1], [0], [0], [1], [0, 0, 1, 1], [], []>} : vector<8x8xf32>, vector<8x128xf32>, vector<8x128xf32> -> vector<8x128xf32>
    %39 = arith.mulf %38, %35 : vector<8x128xf32>
    %cst_33 = arith.constant dense<0.000000e+00> : vector<8x128xf32>
    %40 = tpu.matmul %1, %17, %cst_33 {dimension_numbers = #tpu.dot_dimension_numbers<[1], [0], [0], [1], [0, 0, 1, 1], [], []>} : vector<8x8xf32>, vector<8x128xf32>, vector<8x128xf32> -> vector<8x128xf32>
    %41 = arith.mulf %40, %35 : vector<8x128xf32>
    %cst_34 = arith.constant dense<0.000000e+00> : vector<8x128xf32>
    %42 = tpu.matmul %7, %37, %cst_34 {dimension_numbers = #tpu.dot_dimension_numbers<[1], [0], [0], [1], [0, 0, 1, 1], [], []>} : vector<8x8xf32>, vector<8x128xf32>, vector<8x128xf32> -> vector<8x128xf32>
    %cst_35 = arith.constant dense<0.000000e+00> : vector<8x128xf32>
    %43 = tpu.matmul %7, %39, %cst_35 {dimension_numbers = #tpu.dot_dimension_numbers<[1], [0], [0], [1], [0, 0, 1, 1], [], []>} : vector<8x8xf32>, vector<8x128xf32>, vector<8x128xf32> -> vector<8x128xf32>
    %cst_36 = arith.constant dense<0.000000e+00> : vector<8x128xf32>
    %44 = tpu.matmul %7, %41, %cst_36 {dimension_numbers = #tpu.dot_dimension_numbers<[1], [0], [0], [1], [0, 0, 1, 1], [], []>} : vector<8x8xf32>, vector<8x128xf32>, vector<8x128xf32> -> vector<8x128xf32>
    %45 = arith.mulf %37, %42 : vector<8x128xf32>
    %46 = arith.mulf %39, %43 : vector<8x128xf32>
    %47 = arith.addf %45, %46 : vector<8x128xf32>
    %48 = arith.mulf %41, %44 : vector<8x128xf32>
    %49 = arith.addf %47, %48 : vector<8x128xf32>
    %50 = arith.mulf %42, %42 : vector<8x128xf32>
    %51 = arith.mulf %43, %43 : vector<8x128xf32>
    %52 = arith.addf %50, %51 : vector<8x128xf32>
    %53 = arith.mulf %44, %44 : vector<8x128xf32>
    %54 = arith.addf %52, %53 : vector<8x128xf32>
    %cst_37 = arith.constant 0.000000e+00 : f32
    %55 = vector.broadcast %cst_37 : f32 to vector<8x128xf32>
    %56 = arith.cmpf oge, %49, %55 : vector<8x128xf32>
    %cst_38 = arith.constant 9.900000e-01 : f32
    %57 = vector.broadcast %cst_38 : f32 to vector<8x128xf32>
    %58 = arith.mulf %57, %49 : vector<8x128xf32>
    %cst_39 = arith.constant 9.99999997E-7 : f32
    %59 = vector.broadcast %cst_39 : f32 to vector<8x128xf32>
    %60 = arith.addf %54, %59 : vector<8x128xf32>
    %61 = tpu.reciprocal %60 : vector<8x128xf32> -> vector<8x128xf32>
    %62 = arith.mulf %58, %61 : vector<8x128xf32>
    %cst_40 = arith.constant 0.000000e+00 : f32
    %63 = vector.broadcast %cst_40 : f32 to vector<8x128xf32>
    %64 = arith.select %56, %63, %62 : vector<8x128xi1>, vector<8x128xf32>
    %65 = arith.mulf %64, %42 : vector<8x128xf32>
    %66 = arith.subf %37, %65 : vector<8x128xf32>
    %c0_41 = arith.constant 0 : index
    %c0_42 = arith.constant 0 : index
    %c0_43 = arith.constant 0 : index
    %67 = vector.load %arg12[%c0_41, %c0_42, %c0_43] : memref<3x8x128xf32, #tpu.memory_space<vmem>>, vector<1x8x128xf32>
    %68 = vector.shape_cast %67 : vector<1x8x128xf32> to vector<8x128xf32>
    %69 = vector.shape_cast %66 : vector<8x128xf32> to vector<1x8x128xf32>
    tpu.vector_store %arg12[%c0_41, %c0_42, %c0_43], %69 {strides = array<i32>} : memref<3x8x128xf32, #tpu.memory_space<vmem>>, vector<1x8x128xf32>,
    %70 = arith.mulf %64, %43 : vector<8x128xf32>
    %71 = arith.subf %39, %70 : vector<8x128xf32>
    %c1_44 = arith.constant 1 : index
    %c0_45 = arith.constant 0 : index
    %c0_46 = arith.constant 0 : index
    %72 = vector.load %arg12[%c1_44, %c0_45, %c0_46] : memref<3x8x128xf32, #tpu.memory_space<vmem>>, vector<1x8x128xf32>
    %73 = vector.shape_cast %72 : vector<1x8x128xf32> to vector<8x128xf32>
    %74 = vector.shape_cast %71 : vector<8x128xf32> to vector<1x8x128xf32>
    tpu.vector_store %arg12[%c1_44, %c0_45, %c0_46], %74 {strides = array<i32>} : memref<3x8x128xf32, #tpu.memory_space<vmem>>, vector<1x8x128xf32>,
    %75 = arith.mulf %64, %44 : vector<8x128xf32>
    %76 = arith.subf %41, %75 : vector<8x128xf32>
    %c2_47 = arith.constant 2 : index
    %c0_48 = arith.constant 0 : index
    %c0_49 = arith.constant 0 : index
    %77 = vector.load %arg12[%c2_47, %c0_48, %c0_49] : memref<3x8x128xf32, #tpu.memory_space<vmem>>, vector<1x8x128xf32>
    %78 = vector.shape_cast %77 : vector<1x8x128xf32> to vector<8x128xf32>
    %79 = vector.shape_cast %76 : vector<8x128xf32> to vector<1x8x128xf32>
    tpu.vector_store %arg12[%c2_47, %c0_48, %c0_49], %79 {strides = array<i32>} : memref<3x8x128xf32, #tpu.memory_space<vmem>>, vector<1x8x128xf32>,
    %cst_50 = arith.constant 0.000000e+00 : f32
    %80 = vector.broadcast %cst_50 : f32 to vector<16x128xf32>
    %81 = arith.cmpf oge, %27, %80 : vector<16x128xf32>
    %cst_51 = arith.constant 0.00999999977 : f32
    %82 = vector.broadcast %cst_51 : f32 to vector<16x128xf32>
    %83 = arith.mulf %82, %27 : vector<16x128xf32>
    %84 = arith.select %81, %27, %83 : vector<16x128xi1>, vector<16x128xf32>
    %c0_52 = arith.constant 0 : index
    %c0_53 = arith.constant 0 : index
    %85 = vector.load %arg11[%c0_52, %c0_53] : memref<16x128xf32, #tpu.memory_space<vmem>>, vector<16x128xf32>
    tpu.vector_store %arg11[%c0_52, %c0_53], %84 {strides = array<i32>} : memref<16x128xf32, #tpu.memory_space<vmem>>, vector<16x128xf32>,
    return
  }
  func.func @transform_0(%arg0: i32) -> (i32, i32) {
    %c0_i32 = arith.constant 0 : i32
    %c0_i32_0 = arith.constant 0 : i32
    return %c0_i32, %arg0 : i32, i32
  }
  func.func @transform_1(%arg0: i32) -> (i32, i32, i32) {
    %c0_i32 = arith.constant 0 : i32
    %c0_i32_0 = arith.constant 0 : i32
    %c0_i32_1 = arith.constant 0 : i32
    return %c0_i32, %c0_i32_0, %arg0 : i32, i32, i32
  }
  func.func @transform_2(%arg0: i32) -> (i32, i32) {
    %c0_i32 = arith.constant 0 : i32
    %c0_i32_0 = arith.constant 0 : i32
    %c0_i32_1 = arith.constant 0 : i32
    return %c0_i32, %c0_i32_0 : i32, i32
  }
  func.func @transform_3(%arg0: i32) -> (i32, i32) {
    %c0_i32 = arith.constant 0 : i32
    %c0_i32_0 = arith.constant 0 : i32
    %c0_i32_1 = arith.constant 0 : i32
    return %c0_i32, %c0_i32_0 : i32, i32
  }
  func.func @transform_4(%arg0: i32) -> (i32, i32) {
    %c0_i32 = arith.constant 0 : i32
    %c0_i32_0 = arith.constant 0 : i32
    %c0_i32_1 = arith.constant 0 : i32
    return %c0_i32, %c0_i32_0 : i32, i32
  }
  func.func @transform_5(%arg0: i32) -> (i32, i32) {
    %c0_i32 = arith.constant 0 : i32
    %c0_i32_0 = arith.constant 0 : i32
    %c0_i32_1 = arith.constant 0 : i32
    return %c0_i32, %c0_i32_0 : i32, i32
  }
  func.func @transform_6(%arg0: i32) -> (i32, i32) {
    %c0_i32 = arith.constant 0 : i32
    %c0_i32_0 = arith.constant 0 : i32
    %c0_i32_1 = arith.constant 0 : i32
    return %c0_i32, %c0_i32_0 : i32, i32
  }
  func.func @transform_7(%arg0: i32) -> (i32, i32) {
    %c0_i32 = arith.constant 0 : i32
    %c0_i32_0 = arith.constant 0 : i32
    %c0_i32_1 = arith.constant 0 : i32
    return %c0_i32, %c0_i32_0 : i32, i32
  }
  func.func @transform_8(%arg0: i32) -> (i32, i32) {
    %c0_i32 = arith.constant 0 : i32
    %c0_i32_0 = arith.constant 0 : i32
    %c0_i32_1 = arith.constant 0 : i32
    return %c0_i32, %c0_i32_0 : i32, i32
  }
  func.func @transform_9(%arg0: i32) -> (i32, i32) {
    %c0_i32 = arith.constant 0 : i32
    %c0_i32_0 = arith.constant 0 : i32
    %c0_i32_1 = arith.constant 0 : i32
    return %c0_i32, %c0_i32_0 : i32, i32
  }
  func.func @transform_10(%arg0: i32) -> (i32, i32) {
    %c0_i32 = arith.constant 0 : i32
    %c0_i32_0 = arith.constant 0 : i32
    return %c0_i32, %arg0 : i32, i32
  }
  func.func @transform_11(%arg0: i32) -> (i32, i32, i32) {
    %c0_i32 = arith.constant 0 : i32
    %c0_i32_0 = arith.constant 0 : i32
    %c0_i32_1 = arith.constant 0 : i32
    return %c0_i32, %c0_i32_0, %arg0 : i32, i32, i32
  }
}

</mosaic_0001>

<llo_original>
// kernel: gb_perceptron_vn.1
$region0: #{gb_perceptron_vn.1}
  #allocation0 [shape = 'u32[]', space=smem, size = 0x4, offset = 0x4, fixed_abs, tag = 'smem constant byte address 0x4 - core index']
  #allocation1 [shape = 'u32[144,128]{1,0:T(1,128)}', space=vmem, size = 0x12000, scoped, tag = 'internal scratch']
  %s0 = inlined_call_operand.vmem [shape: f32[16,128], index: 0, kind: input, shape index: {}]
  %s1 = inlined_call_operand.vmem [shape: f32[3,8,128], index: 1, kind: input, shape index: {}]
  %s2 = inlined_call_operand.vmem [shape: f32[8,8], index: 2, kind: input, shape index: {}]
  %s3 = inlined_call_operand.vmem [shape: f32[8,8], index: 3, kind: input, shape index: {}]
  %s4 = inlined_call_operand.vmem [shape: f32[8,16], index: 4, kind: input, shape index: {}]
  %s5 = inlined_call_operand.vmem [shape: f32[16,8], index: 5, kind: input, shape index: {}]
  %s6 = inlined_call_operand.vmem [shape: f32[16,8], index: 6, kind: input, shape index: {}]
  %s7 = inlined_call_operand.vmem [shape: f32[8,16], index: 7, kind: input, shape index: {}]
  %s8 = inlined_call_operand.vmem [shape: f32[8,1], index: 8, kind: input, shape index: {}]
  %s9 = inlined_call_operand.vmem [shape: f32[8,8], index: 9, kind: input, shape index: {}]
  %s10 = inlined_call_operand.vmem [shape: f32[16,128], index: 10, kind: output, shape index: {0}]
  %s11 = inlined_call_operand.vmem [shape: f32[3,8,128], index: 11, kind: output, shape index: {1}]
  %12 = xla_tuple %s10, %s11
  %s13 = sld [smem:[#allocation0]]
  $region58: #{gb_perceptron_vn.1} parent=0
    _
  %s15 = ssub.s32 1, %s13
  %s16 = scalar_select 0, %s15, %s13
  // Predicated region
  $region2: #{gb_perceptron_vn.1} parent=0 // pred_check
    _
  $region3: #{gb_perceptron_vn.1} parent=0 // pred_check_branch
    %18 = sbr.rel (0) target = $region5
  $region4: #{gb_perceptron_vn.1} parent=0 // pred_region
    _
  $region5: #{gb_perceptron_vn.1} parent=0 // pred_fallthru
    _
  // Predicated region
  $region6: #{gb_perceptron_vn.1} parent=0 // pred_check
    _
  $region7: #{gb_perceptron_vn.1} parent=0 // pred_check_branch
    %20 = sbr.rel (0) target = $region9
  $region8: #{gb_perceptron_vn.1} parent=0 // pred_region
    _
  $region9: #{gb_perceptron_vn.1} parent=0 // pred_fallthru
    _
  // Predicated region
  $region10: #{gb_perceptron_vn.1} parent=0 // pred_check
    _
  $region11: #{gb_perceptron_vn.1} parent=0 // pred_check_branch
    %22 = sbr.rel (0) target = $region13
  $region12: #{gb_perceptron_vn.1} parent=0 // pred_region
    _
  $region13: #{gb_perceptron_vn.1} parent=0 // pred_fallthru
    _
  // Predicated region
  $region14: #{gb_perceptron_vn.1} parent=0 // pred_check
    _
  $region15: #{gb_perceptron_vn.1} parent=0 // pred_check_branch
    %24 = sbr.rel (0) target = $region17
  $region16: #{gb_perceptron_vn.1} parent=0 // pred_region
    _
  $region17: #{gb_perceptron_vn.1} parent=0 // pred_fallthru
    _
  // Predicated region
  $region18: #{gb_perceptron_vn.1} parent=0 // pred_check
    _
  $region19: #{gb_perceptron_vn.1} parent=0 // pred_check_branch
    %26 = sbr.rel (0) target = $region21
  $region20: #{gb_perceptron_vn.1} parent=0 // pred_region
    _
  $region21: #{gb_perceptron_vn.1} parent=0 // pred_fallthru
    _
  // Predicated region
  $region22: #{gb_perceptron_vn.1} parent=0 // pred_check
    _
  $region23: #{gb_perceptron_vn.1} parent=0 // pred_check_branch
    %28 = sbr.rel (0) target = $region25
  $region24: #{gb_perceptron_vn.1} parent=0 // pred_region
    _
  $region25: #{gb_perceptron_vn.1} parent=0 // pred_fallthru
    _
  // Predicated region
  $region26: #{gb_perceptron_vn.1} parent=0 // pred_check
    _
  $region27: #{gb_perceptron_vn.1} parent=0 // pred_check_branch
    %30 = sbr.rel (0) target = $region29
  $region28: #{gb_perceptron_vn.1} parent=0 // pred_region
    _
  $region29: #{gb_perceptron_vn.1} parent=0 // pred_fallthru
    _
  // Predicated region
  $region30: #{gb_perceptron_vn.1} parent=0 // pred_check
    _
  $region31: #{gb_perceptron_vn.1} parent=0 // pred_check_branch
    %32 = sbr.rel (0) target = $region33
  $region32: #{gb_perceptron_vn.1} parent=0 // pred_region
    _
  $region33: #{gb_perceptron_vn.1} parent=0 // pred_fallthru
    _
  // Predicated region
  $region34: #{gb_perceptron_vn.1} parent=0 // pred_check
    _
  $region35: #{gb_perceptron_vn.1} parent=0 // pred_check_branch
    %34 = sbr.rel (0) target = $region37
  $region36: #{gb_perceptron_vn.1} parent=0 // pred_region
    _
  $region37: #{gb_perceptron_vn.1} parent=0 // pred_fallthru
    _
  // Predicated region
  $region38: #{gb_perceptron_vn.1} parent=0 // pred_check
    _
  $region39: #{gb_perceptron_vn.1} parent=0 // pred_check_branch
    %36 = sbr.rel (0) target = $region41
  $region40: #{gb_perceptron_vn.1} parent=0 // pred_region
    _
  $region41: #{gb_perceptron_vn.1} parent=0 // pred_fallthru
    _
  %v37 = vld [vmem:[%s2] sm:$0xff]
  %v38 = vld [vmem:[%s3] sm:$0xff]
  %v39 = vld [vmem:[%s4] sm:$0xff]
  %v40 = vld [vmem:[%s5] sm:$0xff]
  %v41 = vld [vmem:[%s5 + $0x8] sm:$0xff]
  %v42 = vld [vmem:[%s6] sm:$0xff]
  %v43 = vld [vmem:[%s6 + $0x8] sm:$0xff]
  %v44 = vld [vmem:[%s7] sm:$0xff]
  %v45 = vld [vmem:[%s8] sm:$0xff]
  %v46 = vld [vmem:[%s9] sm:$0xff]
  %v47 = vld [vmem:[%s0] sm:$0xff]
  %v48 = vld [vmem:[%s0 + $0x8] sm:$0xff]
  %v49 = vld [vmem:[%s1] sm:$0xff]
  %vm50 = vcmask 64512
  %v52 = vsel %vm50, %v37, 0
  %54 = vmatprep.subr.mxu0 0.0
  %55 = vmatpush1.msra.mxu0 %v49
  %56 = vmatprep.subr.mxu0 0.0
  %57 = vmatpush1.msra.mxu0 0.0
  %58 = vmatprep.subr.mxu0 0.0
  %59 = vmatpush1.msra.mxu0 0.0
  %60 = vmatprep.subr.mxu0 0.0
  %61 = vmatpush1.msra.mxu0 0.0
  %62 = vmatprep.subr.mxu0 0.0
  %63 = vmatpush1.msra.mxu0 0.0
  %64 = vmatprep.subr.mxu0 0.0
  %65 = vmatpush1.msra.mxu0 0.0
  %66 = vmatprep.subr.mxu0 0.0
  %67 = vmatpush1.msra.mxu0 0.0
  %68 = vmatprep.subr.mxu0 0.0
  %69 = vmatpush1.msra.mxu0 0.0
  %70 = vmatprep.subr.mxu0 0.0
  %71 = vmatpush1.msra.mxu0 0.0
  %72 = vmatprep.subr.mxu0 0.0
  %73 = vmatpush1.msra.mxu0 0.0
  %74 = vmatprep.subr.mxu0 0.0
  %75 = vmatpush1.msra.mxu0 0.0
  %76 = vmatprep.subr.mxu0 0.0
  %77 = vmatpush1.msra.mxu0 0.0
  %78 = vmatprep.subr.mxu0 0.0
  %79 = vmatpush1.msra.mxu0 0.0
  %80 = vmatprep.subr.mxu0 0.0
  %81 = vmatpush1.msra.mxu0 0.0
  %82 = vmatprep.subr.mxu0 0.0
  %83 = vmatpush1.msra.mxu0 0.0
  %84 = vmatprep.subr.mxu0 0.0
  %85 = vmatpush1.msra.mxu0 0.0
  %86 = vmatprep.subr.mxu0 0.0
  %87 = vmatpush1.msra.mxu0 0.0
  %88 = vmatprep.subr.mxu0 0.0
  %89 = vmatpush1.msra.mxu0 0.0
  %90 = vmatprep.subr.mxu0 0.0
  %91 = vmatpush1.msra.mxu0 0.0
  %92 = vmatprep.subr.mxu0 0.0
  %93 = vmatpush1.msra.mxu0 0.0
  %94 = vmatprep.subr.mxu0 0.0
  %95 = vmatpush1.msra.mxu0 0.0
  %96 = vmatprep.subr.mxu0 0.0
  %97 = vmatpush1.msra.mxu0 0.0
  %98 = vmatprep.subr.mxu0 0.0
  %99 = vmatpush1.msra.mxu0 0.0
  %100 = vmatprep.subr.mxu0 0.0
  %101 = vmatpush1.msra.mxu0 0.0
  %102 = vmatprep.subr.mxu0 0.0
  %103 = vmatpush1.msra.mxu0 0.0
  %104 = vmatprep.subr.mxu0 0.0
  %105 = vmatpush1.msra.mxu0 0.0
  %106 = vmatprep.subr.mxu0 0.0
  %107 = vmatpush1.msra.mxu0 0.0
  %108 = vmatprep.subr.mxu0 0.0
  %109 = vmatpush1.msra.mxu0 0.0
  %110 = vmatprep.subr.mxu0 0.0
  %111 = vmatpush1.msra.mxu0 0.0
  %112 = vmatprep.subr.mxu0 0.0
  %113 = vmatpush1.msra.mxu0 0.0
  %114 = vmatprep.subr.mxu0 0.0
  %115 = vmatpush1.msra.mxu0 0.0
  %116 = vmatprep.subr.mxu0 0.0
  %117 = vmatpush1.msra.mxu0 0.0
  %118 = vmatprep.mubr.f32.mxu0 0.0
  %119 = vmatmul.mubr.f32.gmra.mrb[0].mxu0 %v52
  %v120 = vpop.f32.mrb[0].mxu0
  %v121 = vadd.f32 0.0, %v120
  %v122 = vpop.f32.mrb[0].mxu0
  %123 = vdwg.mxu0
  %s124 = scalar_lea.vmem %s1, 8
  %v125 = vld [vmem:[%s124] sm:$0xff]
  %126 = vmatprep.subr.mxu0 0.0
  %127 = vmatpush1.msra.mxu0 %v125
  %128 = vmatprep.subr.mxu0 0.0
  %129 = vmatpush1.msra.mxu0 0.0
  %130 = vmatprep.subr.mxu0 0.0
  %131 = vmatpush1.msra.mxu0 0.0
  %132 = vmatprep.subr.mxu0 0.0
  %133 = vmatpush1.msra.mxu0 0.0
  %134 = vmatprep.subr.mxu0 0.0
  %135 = vmatpush1.msra.mxu0 0.0
  %136 = vmatprep.subr.mxu0 0.0
  %137 = vmatpush1.msra.mxu0 0.0
  %138 = vmatprep.subr.mxu0 0.0
  %139 = vmatpush1.msra.mxu0 0.0
  %140 = vmatprep.subr.mxu0 0.0
  %141 = vmatpush1.msra.mxu0 0.0
  %142 = vmatprep.subr.mxu0 0.0
  %143 = vmatpush1.msra.mxu0 0.0
  %144 = vmatprep.subr.mxu0 0.0
  %145 = vmatpush1.msra.mxu0 0.0
  %146 = vmatprep.subr.mxu0 0.0
  %147 = vmatpush1.msra.mxu0 0.0
  %148 = vmatprep.subr.mxu0 0.0
  %149 = vmatpush1.msra.mxu0 0.0
  %150 = vmatprep.subr.mxu0 0.0
  %151 = vmatpush1.msra.mxu0 0.0
  %152 = vmatprep.subr.mxu0 0.0
  %153 = vmatpush1.msra.mxu0 0.0
  %154 = vmatprep.subr.mxu0 0.0
  %155 = vmatpush1.msra.mxu0 0.0
  %156 = vmatprep.subr.mxu0 0.0
  %157 = vmatpush1.msra.mxu0 0.0
  %158 = vmatprep.subr.mxu0 0.0
  %159 = vmatpush1.msra.mxu0 0.0
  %160 = vmatprep.subr.mxu0 0.0
  %161 = vmatpush1.msra.mxu0 0.0
  %162 = vmatprep.subr.mxu0 0.0
  %163 = vmatpush1.msra.mxu0 0.0
  %164 = vmatprep.subr.mxu0 0.0
  %165 = vmatpush1.msra.mxu0 0.0
  %166 = vmatprep.subr.mxu0 0.0
  %167 = vmatpush1.msra.mxu0 0.0
  %168 = vmatprep.subr.mxu0 0.0
  %169 = vmatpush1.msra.mxu0 0.0
  %170 = vmatprep.subr.mxu0 0.0
  %171 = vmatpush1.msra.mxu0 0.0
  %172 = vmatprep.subr.mxu0 0.0
  %173 = vmatpush1.msra.mxu0 0.0
  %174 = vmatprep.subr.mxu0 0.0
  %175 = vmatpush1.msra.mxu0 0.0
  %176 = vmatprep.subr.mxu0 0.0
  %177 = vmatpush1.msra.mxu0 0.0
  %178 = vmatprep.subr.mxu0 0.0
  %179 = vmatpush1.msra.mxu0 0.0
  %180 = vmatprep.subr.mxu0 0.0
  %181 = vmatpush1.msra.mxu0 0.0
  %182 = vmatprep.subr.mxu0 0.0
  %183 = vmatpush1.msra.mxu0 0.0
  %184 = vmatprep.subr.mxu0 0.0
  %185 = vmatpush1.msra.mxu0 0.0
  %186 = vmatprep.subr.mxu0 0.0
  %187 = vmatpush1.msra.mxu0 0.0
  %188 = vmatprep.subr.mxu0 0.0
  %189 = vmatpush1.msra.mxu0 0.0
  %190 = vmatprep.mubr.f32.mxu0 0.0
  %191 = vmatmul.mubr.f32.gmra.mrb[0].mxu0 %v52
  %v192 = vpop.f32.mrb[0].mxu0
  %v193 = vadd.f32 0.0, %v192
  %v194 = vpop.f32.mrb[0].mxu0
  %195 = vdwg.mxu0
  %s196 = scalar_lea.vmem %s1, 16
  %v197 = vld [vmem:[%s196] sm:$0xff]
  %198 = vmatprep.subr.mxu0 0.0
  %199 = vmatpush1.msra.mxu0 %v197
  %200 = vmatprep.subr.mxu0 0.0
  %201 = vmatpush1.msra.mxu0 0.0
  %202 = vmatprep.subr.mxu0 0.0
  %203 = vmatpush1.msra.mxu0 0.0
  %204 = vmatprep.subr.mxu0 0.0
  %205 = vmatpush1.msra.mxu0 0.0
  %206 = vmatprep.subr.mxu0 0.0
  %207 = vmatpush1.msra.mxu0 0.0
  %208 = vmatprep.subr.mxu0 0.0
  %209 = vmatpush1.msra.mxu0 0.0
  %210 = vmatprep.subr.mxu0 0.0
  %211 = vmatpush1.msra.mxu0 0.0
  %212 = vmatprep.subr.mxu0 0.0
  %213 = vmatpush1.msra.mxu0 0.0
  %214 = vmatprep.subr.mxu0 0.0
  %215 = vmatpush1.msra.mxu0 0.0
  %216 = vmatprep.subr.mxu0 0.0
  %217 = vmatpush1.msra.mxu0 0.0
  %218 = vmatprep.subr.mxu0 0.0
  %219 = vmatpush1.msra.mxu0 0.0
  %220 = vmatprep.subr.mxu0 0.0
  %221 = vmatpush1.msra.mxu0 0.0
  %222 = vmatprep.subr.mxu0 0.0
  %223 = vmatpush1.msra.mxu0 0.0
  %224 = vmatprep.subr.mxu0 0.0
  %225 = vmatpush1.msra.mxu0 0.0
  %226 = vmatprep.subr.mxu0 0.0
  %227 = vmatpush1.msra.mxu0 0.0
  %228 = vmatprep.subr.mxu0 0.0
  %229 = vmatpush1.msra.mxu0 0.0
  %230 = vmatprep.subr.mxu0 0.0
  %231 = vmatpush1.msra.mxu0 0.0
  %232 = vmatprep.subr.mxu0 0.0
  %233 = vmatpush1.msra.mxu0 0.0
  %234 = vmatprep.subr.mxu0 0.0
  %235 = vmatpush1.msra.mxu0 0.0
  %236 = vmatprep.subr.mxu0 0.0
  %237 = vmatpush1.msra.mxu0 0.0
  %238 = vmatprep.subr.mxu0 0.0
  %239 = vmatpush1.msra.mxu0 0.0
  %240 = vmatprep.subr.mxu0 0.0
  %241 = vmatpush1.msra.mxu0 0.0
  %242 = vmatprep.subr.mxu0 0.0
  %243 = vmatpush1.msra.mxu0 0.0
  %244 = vmatprep.subr.mxu0 0.0
  %245 = vmatpush1.msra.mxu0 0.0
  %246 = vmatprep.subr.mxu0 0.0
  %247 = vmatpush1.msra.mxu0 0.0
  %248 = vmatprep.subr.mxu0 0.0
  %249 = vmatpush1.msra.mxu0 0.0
  %250 = vmatprep.subr.mxu0 0.0
  %251 = vmatpush1.msra.mxu0 0.0
  %252 = vmatprep.subr.mxu0 0.0
  %253 = vmatpush1.msra.mxu0 0.0
  %254 = vmatprep.subr.mxu0 0.0
  %255 = vmatpush1.msra.mxu0 0.0
  %256 = vmatprep.subr.mxu0 0.0
  %257 = vmatpush1.msra.mxu0 0.0
  %258 = vmatprep.subr.mxu0 0.0
  %259 = vmatpush1.msra.mxu0 0.0
  %260 = vmatprep.subr.mxu0 0.0
  %261 = vmatpush1.msra.mxu0 0.0
  %262 = vmatprep.mubr.f32.mxu0 0.0
  %263 = vmatmul.mubr.f32.gmra.mrb[0].mxu0 %v52
  %v264 = vpop.f32.mrb[0].mxu0
  %v265 = vadd.f32 0.0, %v264
  %v266 = vpop.f32.mrb[0].mxu0
  %267 = vdwg.mxu0
  %v268 = vmul.f32 %v121, %v121
  %v269 = vmul.f32 %v193, %v193
  %v270 = vadd.f32 %v268, %v269
  %v271 = vmul.f32 %v265, %v265
  %v272 = vadd.f32 %v270, %v271
  %v273 = vrsqrt.pop %v272
  %v274 = vmul.f32 %v272, %v273
  %vm275 = vcmp.eq.f32.partialorder %v272, inf
  %v276 = vsel %vm275, %v272, %v274
  %vm277 = vcmp.eq.f32.partialorder %v272, 0.0
  %v278 = vand.u32 %v272, 2147483648
  %v279 = vsel %vm277, %v278, %v276
  %vm280 = vcmask 130048
  %v282 = vsel %vm280, %v39, 0
  %284 = vmatprep.subr.mxu0 0.0
  %285 = vmatpush1.msra.mxu0 %v47
  %286 = vmatprep.subr.mxu0 0.0
  %287 = vmatpush1.msra.mxu0 %v48
  %288 = vmatprep.subr.mxu0 0.0
  %289 = vmatpush1.msra.mxu0 0.0
  %290 = vmatprep.subr.mxu0 0.0
  %291 = vmatpush1.msra.mxu0 0.0
  %292 = vmatprep.subr.mxu0 0.0
  %293 = vmatpush1.msra.mxu0 0.0
  %294 = vmatprep.subr.mxu0 0.0
  %295 = vmatpush1.msra.mxu0 0.0
  %296 = vmatprep.subr.mxu0 0.0
  %297 = vmatpush1.msra.mxu0 0.0
  %298 = vmatprep.subr.mxu0 0.0
  %299 = vmatpush1.msra.mxu0 0.0
  %300 = vmatprep.subr.mxu0 0.0
  %301 = vmatpush1.msra.mxu0 0.0
  %302 = vmatprep.subr.mxu0 0.0
  %303 = vmatpush1.msra.mxu0 0.0
  %304 = vmatprep.subr.mxu0 0.0
  %305 = vmatpush1.msra.mxu0 0.0
  %306 = vmatprep.subr.mxu0 0.0
  %307 = vmatpush1.msra.mxu0 0.0
  %308 = vmatprep.subr.mxu0 0.0
  %309 = vmatpush1.msra.mxu0 0.0
  %310 = vmatprep.subr.mxu0 0.0
  %311 = vmatpush1.msra.mxu0 0.0
  %312 = vmatprep.subr.mxu0 0.0
  %313 = vmatpush1.msra.mxu0 0.0
  %314 = vmatprep.subr.mxu0 0.0
  %315 = vmatpush1.msra.mxu0 0.0
  %316 = vmatprep.subr.mxu0 0.0
  %317 = vmatpush1.msra.mxu0 0.0
  %318 = vmatprep.subr.mxu0 0.0
  %319 = vmatpush1.msra.mxu0 0.0
  %320 = vmatprep.subr.mxu0 0.0
  %321 = vmatpush1.msra.mxu0 0.0
  %322 = vmatprep.subr.mxu0 0.0
  %323 = vmatpush1.msra.mxu0 0.0
  %324 = vmatprep.subr.mxu0 0.0
  %325 = vmatpush1.msra.mxu0 0.0
  %326 = vmatprep.subr.mxu0 0.0
  %327 = vmatpush1.msra.mxu0 0.0
  %328 = vmatprep.subr.mxu0 0.0
  %329 = vmatpush1.msra.mxu0 0.0
  %330 = vmatprep.subr.mxu0 0.0
  %331 = vmatpush1.msra.mxu0 0.0
  %332 = vmatprep.subr.mxu0 0.0
  %333 = vmatpush1.msra.mxu0 0.0
  %334 = vmatprep.subr.mxu0 0.0
  %335 = vmatpush1.msra.mxu0 0.0
  %336 = vmatprep.subr.mxu0 0.0
  %337 = vmatpush1.msra.mxu0 0.0
  %338 = vmatprep.subr.mxu0 0.0
  %339 = vmatpush1.msra.mxu0 0.0
  %340 = vmatprep.subr.mxu0 0.0
  %341 = vmatpush1.msra.mxu0 0.0
  %342 = vmatprep.subr.mxu0 0.0
  %343 = vmatpush1.msra.mxu0 0.0
  %344 = vmatprep.subr.mxu0 0.0
  %345 = vmatpush1.msra.mxu0 0.0
  %346 = vmatprep.subr.mxu0 0.0
  %347 = vmatpush1.msra.mxu0 0.0
  %348 = vmatprep.mubr.f32.mxu0 0.0
  %349 = vmatmul.mubr.f32.gmra.mrb[0].mxu0 %v282
  %v350 = vpop.f32.mrb[0].mxu0
  %v351 = vadd.f32 0.0, %v350
  %v352 = vpop.f32.mrb[0].mxu0
  %353 = vdwg.mxu0
  %v355 = vsel %vm50, %v42, 0
  %v358 = vsel %vm50, %v43, 0
  %360 = vmatprep.subr.mxu0 0.0
  %361 = vmatpush1.msra.mxu0 %v351
  %362 = vmatprep.subr.mxu0 0.0
  %363 = vmatpush1.msra.mxu0 0.0
  %364 = vmatprep.subr.mxu0 0.0
  %365 = vmatpush1.msra.mxu0 0.0
  %366 = vmatprep.subr.mxu0 0.0
  %367 = vmatpush1.msra.mxu0 0.0
  %368 = vmatprep.subr.mxu0 0.0
  %369 = vmatpush1.msra.mxu0 0.0
  %370 = vmatprep.subr.mxu0 0.0
  %371 = vmatpush1.msra.mxu0 0.0
  %372 = vmatprep.subr.mxu0 0.0
  %373 = vmatpush1.msra.mxu0 0.0
  %374 = vmatprep.subr.mxu0 0.0
  %375 = vmatpush1.msra.mxu0 0.0
  %376 = vmatprep.subr.mxu0 0.0
  %377 = vmatpush1.msra.mxu0 0.0
  %378 = vmatprep.subr.mxu0 0.0
  %379 = vmatpush1.msra.mxu0 0.0
  %380 = vmatprep.subr.mxu0 0.0
  %381 = vmatpush1.msra.mxu0 0.0
  %382 = vmatprep.subr.mxu0 0.0
  %383 = vmatpush1.msra.mxu0 0.0
  %384 = vmatprep.subr.mxu0 0.0
  %385 = vmatpush1.msra.mxu0 0.0
  %386 = vmatprep.subr.mxu0 0.0
  %387 = vmatpush1.msra.mxu0 0.0
  %388 = vmatprep.subr.mxu0 0.0
  %389 = vmatpush1.msra.mxu0 0.0
  %390 = vmatprep.subr.mxu0 0.0
  %391 = vmatpush1.msra.mxu0 0.0
  %392 = vmatprep.subr.mxu0 0.0
  %393 = vmatpush1.msra.mxu0 0.0
  %394 = vmatprep.subr.mxu0 0.0
  %395 = vmatpush1.msra.mxu0 0.0
  %396 = vmatprep.subr.mxu0 0.0
  %397 = vmatpush1.msra.mxu0 0.0
  %398 = vmatprep.subr.mxu0 0.0
  %399 = vmatpush1.msra.mxu0 0.0
  %400 = vmatprep.subr.mxu0 0.0
  %401 = vmatpush1.msra.mxu0 0.0
  %402 = vmatprep.subr.mxu0 0.0
  %403 = vmatpush1.msra.mxu0 0.0
  %404 = vmatprep.subr.mxu0 0.0
  %405 = vmatpush1.msra.mxu0 0.0
  %406 = vmatprep.subr.mxu0 0.0
  %407 = vmatpush1.msra.mxu0 0.0
  %408 = vmatprep.subr.mxu0 0.0
  %409 = vmatpush1.msra.mxu0 0.0
  %410 = vmatprep.subr.mxu0 0.0
  %411 = vmatpush1.msra.mxu0 0.0
  %412 = vmatprep.subr.mxu0 0.0
  %413 = vmatpush1.msra.mxu0 0.0
  %414 = vmatprep.subr.mxu0 0.0
  %415 = vmatpush1.msra.mxu0 0.0
  %416 = vmatprep.subr.mxu0 0.0
  %417 = vmatpush1.msra.mxu0 0.0
  %418 = vmatprep.subr.mxu0 0.0
  %419 = vmatpush1.msra.mxu0 0.0
  %420 = vmatprep.subr.mxu0 0.0
  %421 = vmatpush1.msra.mxu0 0.0
  %422 = vmatprep.subr.mxu0 0.0
  %423 = vmatpush1.msra.mxu0 0.0
  %424 = vmatprep.mubr.f32.mxu0 0.0
  %425 = vmatmul.mubr.f32.gmra.mrb[0].mxu0 %v355
  %v426 = vpop.f32.mrb[0].mxu0
  %v427 = vadd.f32 0.0, %v426
  %v428 = vpop.f32.mrb[0].mxu0
  %429 = vmatprep.mubr.f32.mxu0 0.0
  %430 = vmatmul.mubr.f32.gmra.mrb[0].mxu0 %v358
  %v431 = vpop.f32.mrb[0].mxu0
  %v432 = vadd.f32 0.0, %v431
  %v433 = vpop.f32.mrb[0].mxu0
  %434 = vdwg.mxu0
  %v436 = vsel %vm50, %v40, 0
  %v439 = vsel %vm50, %v41, 0
  %441 = vmatprep.subr.mxu0 0.0
  %442 = vmatpush1.msra.mxu0 %v279
  %443 = vmatprep.subr.mxu0 0.0
  %444 = vmatpush1.msra.mxu0 0.0
  %445 = vmatprep.subr.mxu0 0.0
  %446 = vmatpush1.msra.mxu0 0.0
  %447 = vmatprep.subr.mxu0 0.0
  %448 = vmatpush1.msra.mxu0 0.0
  %449 = vmatprep.subr.mxu0 0.0
  %450 = vmatpush1.msra.mxu0 0.0
  %451 = vmatprep.subr.mxu0 0.0
  %452 = vmatpush1.msra.mxu0 0.0
  %453 = vmatprep.subr.mxu0 0.0
  %454 = vmatpush1.msra.mxu0 0.0
  %455 = vmatprep.subr.mxu0 0.0
  %456 = vmatpush1.msra.mxu0 0.0
  %457 = vmatprep.subr.mxu0 0.0
  %458 = vmatpush1.msra.mxu0 0.0
  %459 = vmatprep.subr.mxu0 0.0
  %460 = vmatpush1.msra.mxu0 0.0
  %461 = vmatprep.subr.mxu0 0.0
  %462 = vmatpush1.msra.mxu0 0.0
  %463 = vmatprep.subr.mxu0 0.0
  %464 = vmatpush1.msra.mxu0 0.0
  %465 = vmatprep.subr.mxu0 0.0
  %466 = vmatpush1.msra.mxu0 0.0
  %467 = vmatprep.subr.mxu0 0.0
  %468 = vmatpush1.msra.mxu0 0.0
  %469 = vmatprep.subr.mxu0 0.0
  %470 = vmatpush1.msra.mxu0 0.0
  %471 = vmatprep.subr.mxu0 0.0
  %472 = vmatpush1.msra.mxu0 0.0
  %473 = vmatprep.subr.mxu0 0.0
  %474 = vmatpush1.msra.mxu0 0.0
  %475 = vmatprep.subr.mxu0 0.0
  %476 = vmatpush1.msra.mxu0 0.0
  %477 = vmatprep.subr.mxu0 0.0
  %478 = vmatpush1.msra.mxu0 0.0
  %479 = vmatprep.subr.mxu0 0.0
  %480 = vmatpush1.msra.mxu0 0.0
  %481 = vmatprep.subr.mxu0 0.0
  %482 = vmatpush1.msra.mxu0 0.0
  %483 = vmatprep.subr.mxu0 0.0
  %484 = vmatpush1.msra.mxu0 0.0
  %485 = vmatprep.subr.mxu0 0.0
  %486 = vmatpush1.msra.mxu0 0.0
  %487 = vmatprep.subr.mxu0 0.0
  %488 = vmatpush1.msra.mxu0 0.0
  %489 = vmatprep.subr.mxu0 0.0
  %490 = vmatpush1.msra.mxu0 0.0
  %491 = vmatprep.subr.mxu0 0.0
  %492 = vmatpush1.msra.mxu0 0.0
  %493 = vmatprep.subr.mxu0 0.0
  %494 = vmatpush1.msra.mxu0 0.0
  %495 = vmatprep.subr.mxu0 0.0
  %496 = vmatpush1.msra.mxu0 0.0
  %497 = vmatprep.subr.mxu0 0.0
  %498 = vmatpush1.msra.mxu0 0.0
  %499 = vmatprep.subr.mxu0 0.0
  %500 = vmatpush1.msra.mxu0 0.0
  %501 = vmatprep.subr.mxu0 0.0
  %502 = vmatpush1.msra.mxu0 0.0
  %503 = vmatprep.subr.mxu0 0.0
  %504 = vmatpush1.msra.mxu0 0.0
  %505 = vmatprep.mubr.f32.mxu0 0.0
  %506 = vmatmul.mubr.f32.gmra.mrb[0].mxu0 %v436
  %v507 = vpop.f32.mrb[0].mxu0
  %v508 = vadd.f32 %v427, %v507
  %v509 = vpop.f32.mrb[0].mxu0
  %510 = vmatprep.mubr.f32.mxu0 0.0
  %511 = vmatmul.mubr.f32.gmra.mrb[0].mxu0 %v439
  %v512 = vpop.f32.mrb[0].mxu0
  %v513 = vadd.f32 %v432, %v512
  %v514 = vpop.f32.mrb[0].mxu0
  %515 = vdwg.mxu0
  %517 = vset.pattern.permute.xlu0 0
  %518 = vperm.xlu0 %517, %v45
  %v519 = vpop.permute.xlu0 %518
  %v522 = vsel %vm280, %v44, 0
  %524 = vmatprep.subr.mxu0 0.0
  %525 = vmatpush1.msra.mxu0 %v508
  %526 = vmatprep.subr.mxu0 0.0
  %527 = vmatpush1.msra.mxu0 %v513
  %528 = vmatprep.subr.mxu0 0.0
  %529 = vmatpush1.msra.mxu0 0.0
  %530 = vmatprep.subr.mxu0 0.0
  %531 = vmatpush1.msra.mxu0 0.0
  %532 = vmatprep.subr.mxu0 0.0
  %533 = vmatpush1.msra.mxu0 0.0
  %534 = vmatprep.subr.mxu0 0.0
  %535 = vmatpush1.msra.mxu0 0.0
  %536 = vmatprep.subr.mxu0 0.0
  %537 = vmatpush1.msra.mxu0 0.0
  %538 = vmatprep.subr.mxu0 0.0
  %539 = vmatpush1.msra.mxu0 0.0
  %540 = vmatprep.subr.mxu0 0.0
  %541 = vmatpush1.msra.mxu0 0.0
  %542 = vmatprep.subr.mxu0 0.0
  %543 = vmatpush1.msra.mxu0 0.0
  %544 = vmatprep.subr.mxu0 0.0
  %545 = vmatpush1.msra.mxu0 0.0
  %546 = vmatprep.subr.mxu0 0.0
  %547 = vmatpush1.msra.mxu0 0.0
  %548 = vmatprep.subr.mxu0 0.0
  %549 = vmatpush1.msra.mxu0 0.0
  %550 = vmatprep.subr.mxu0 0.0
  %551 = vmatpush1.msra.mxu0 0.0
  %552 = vmatprep.subr.mxu0 0.0
  %553 = vmatpush1.msra.mxu0 0.0
  %554 = vmatprep.subr.mxu0 0.0
  %555 = vmatpush1.msra.mxu0 0.0
  %556 = vmatprep.subr.mxu0 0.0
  %557 = vmatpush1.msra.mxu0 0.0
  %558 = vmatprep.subr.mxu0 0.0
  %559 = vmatpush1.msra.mxu0 0.0
  %560 = vmatprep.subr.mxu0 0.0
  %561 = vmatpush1.msra.mxu0 0.0
  %562 = vmatprep.subr.mxu0 0.0
  %563 = vmatpush1.msra.mxu0 0.0
  %564 = vmatprep.subr.mxu0 0.0
  %565 = vmatpush1.msra.mxu0 0.0
  %566 = vmatprep.subr.mxu0 0.0
  %567 = vmatpush1.msra.mxu0 0.0
  %568 = vmatprep.subr.mxu0 0.0
  %569 = vmatpush1.msra.mxu0 0.0
  %570 = vmatprep.subr.mxu0 0.0
  %571 = vmatpush1.msra.mxu0 0.0
  %572 = vmatprep.subr.mxu0 0.0
  %573 = vmatpush1.msra.mxu0 0.0
  %574 = vmatprep.subr.mxu0 0.0
  %575 = vmatpush1.msra.mxu0 0.0
  %576 = vmatprep.subr.mxu0 0.0
  %577 = vmatpush1.msra.mxu0 0.0
  %578 = vmatprep.subr.mxu0 0.0
  %579 = vmatpush1.msra.mxu0 0.0
  %580 = vmatprep.subr.mxu0 0.0
  %581 = vmatpush1.msra.mxu0 0.0
  %582 = vmatprep.subr.mxu0 0.0
  %583 = vmatpush1.msra.mxu0 0.0
  %584 = vmatprep.subr.mxu0 0.0
  %585 = vmatpush1.msra.mxu0 0.0
  %586 = vmatprep.subr.mxu0 0.0
  %587 = vmatpush1.msra.mxu0 0.0
  %588 = vmatprep.mubr.f32.mxu0 0.0
  %589 = vmatmul.mubr.f32.gmra.mrb[0].mxu0 %v522
  %v590 = vpop.f32.mrb[0].mxu0
  %v591 = vadd.f32 %v519, %v590
  %v592 = vpop.f32.mrb[0].mxu0
  %593 = vdwg.mxu0
  %v594 = vxor.u32 %v591, 2147483648
  %v595 = vmul.f32 %v594, 1.442695
  %v596 = vpow.pop %v595
  %v597 = vadd.f32 %v596, 1.0
  %v598 = vrcp.pop %v597
  %v599 = vmul.f32 1.0, %v598
  %v601 = vsel %vm50, %v38, 0
  %603 = vmatprep.subr.mxu0 0.0
  %604 = vmatpush1.msra.mxu0 %v121
  %605 = vmatprep.subr.mxu0 0.0
  %606 = vmatpush1.msra.mxu0 0.0
  %607 = vmatprep.subr.mxu0 0.0
  %608 = vmatpush1.msra.mxu0 0.0
  %609 = vmatprep.subr.mxu0 0.0
  %610 = vmatpush1.msra.mxu0 0.0
  %611 = vmatprep.subr.mxu0 0.0
  %612 = vmatpush1.msra.mxu0 0.0
  %613 = vmatprep.subr.mxu0 0.0
  %614 = vmatpush1.msra.mxu0 0.0
  %615 = vmatprep.subr.mxu0 0.0
  %616 = vmatpush1.msra.mxu0 0.0
  %617 = vmatprep.subr.mxu0 0.0
  %618 = vmatpush1.msra.mxu0 0.0
  %619 = vmatprep.subr.mxu0 0.0
  %620 = vmatpush1.msra.mxu0 0.0
  %621 = vmatprep.subr.mxu0 0.0
  %622 = vmatpush1.msra.mxu0 0.0
  %623 = vmatprep.subr.mxu0 0.0
  %624 = vmatpush1.msra.mxu0 0.0
  %625 = vmatprep.subr.mxu0 0.0
  %626 = vmatpush1.msra.mxu0 0.0
  %627 = vmatprep.subr.mxu0 0.0
  %628 = vmatpush1.msra.mxu0 0.0
  %629 = vmatprep.subr.mxu0 0.0
  %630 = vmatpush1.msra.mxu0 0.0
  %631 = vmatprep.subr.mxu0 0.0
  %632 = vmatpush1.msra.mxu0 0.0
  %633 = vmatprep.subr.mxu0 0.0
  %634 = vmatpush1.msra.mxu0 0.0
  %635 = vmatprep.subr.mxu0 0.0
  %636 = vmatpush1.msra.mxu0 0.0
  %637 = vmatprep.subr.mxu0 0.0
  %638 = vmatpush1.msra.mxu0 0.0
  %639 = vmatprep.subr.mxu0 0.0
  %640 = vmatpush1.msra.mxu0 0.0
  %641 = vmatprep.subr.mxu0 0.0
  %642 = vmatpush1.msra.mxu0 0.0
  %643 = vmatprep.subr.mxu0 0.0
  %644 = vmatpush1.msra.mxu0 0.0
  %645 = vmatprep.subr.mxu0 0.0
  %646 = vmatpush1.msra.mxu0 0.0
  %647 = vmatprep.subr.mxu0 0.0
  %648 = vmatpush1.msra.mxu0 0.0
  %649 = vmatprep.subr.mxu0 0.0
  %650 = vmatpush1.msra.mxu0 0.0
  %651 = vmatprep.subr.mxu0 0.0
  %652 = vmatpush1.msra.mxu0 0.0
  %653 = vmatprep.subr.mxu0 0.0
  %654 = vmatpush1.msra.mxu0 0.0
  %655 = vmatprep.subr.mxu0 0.0
  %656 = vmatpush1.msra.mxu0 0.0
  %657 = vmatprep.subr.mxu0 0.0
  %658 = vmatpush1.msra.mxu0 0.0
  %659 = vmatprep.subr.mxu0 0.0
  %660 = vmatpush1.msra.mxu0 0.0
  %661 = vmatprep.subr.mxu0 0.0
  %662 = vmatpush1.msra.mxu0 0.0
  %663 = vmatprep.subr.mxu0 0.0
  %664 = vmatpush1.msra.mxu0 0.0
  %665 = vmatprep.subr.mxu0 0.0
  %666 = vmatpush1.msra.mxu0 0.0
  %667 = vmatprep.mubr.f32.mxu0 0.0
  %668 = vmatmul.mubr.f32.gmra.mrb[0].mxu0 %v601
  %v669 = vpop.f32.mrb[0].mxu0
  %v670 = vadd.f32 0.0, %v669
  %v671 = vpop.f32.mrb[0].mxu0
  %672 = vdwg.mxu0
  %v673 = vmul.f32 %v670, %v599
  %674 = vmatprep.subr.mxu0 0.0
  %675 = vmatpush1.msra.mxu0 %v193
  %676 = vmatprep.subr.mxu0 0.0
  %677 = vmatpush1.msra.mxu0 0.0
  %678 = vmatprep.subr.mxu0 0.0
  %679 = vmatpush1.msra.mxu0 0.0
  %680 = vmatprep.subr.mxu0 0.0
  %681 = vmatpush1.msra.mxu0 0.0
  %682 = vmatprep.subr.mxu0 0.0
  %683 = vmatpush1.msra.mxu0 0.0
  %684 = vmatprep.subr.mxu0 0.0
  %685 = vmatpush1.msra.mxu0 0.0
  %686 = vmatprep.subr.mxu0 0.0
  %687 = vmatpush1.msra.mxu0 0.0
  %688 = vmatprep.subr.mxu0 0.0
  %689 = vmatpush1.msra.mxu0 0.0
  %690 = vmatprep.subr.mxu0 0.0
  %691 = vmatpush1.msra.mxu0 0.0
  %692 = vmatprep.subr.mxu0 0.0
  %693 = vmatpush1.msra.mxu0 0.0
  %694 = vmatprep.subr.mxu0 0.0
  %695 = vmatpush1.msra.mxu0 0.0
  %696 = vmatprep.subr.mxu0 0.0
  %697 = vmatpush1.msra.mxu0 0.0
  %698 = vmatprep.subr.mxu0 0.0
  %699 = vmatpush1.msra.mxu0 0.0
  %700 = vmatprep.subr.mxu0 0.0
  %701 = vmatpush1.msra.mxu0 0.0
  %702 = vmatprep.subr.mxu0 0.0
  %703 = vmatpush1.msra.mxu0 0.0
  %704 = vmatprep.subr.mxu0 0.0
  %705 = vmatpush1.msra.mxu0 0.0
  %706 = vmatprep.subr.mxu0 0.0
  %707 = vmatpush1.msra.mxu0 0.0
  %708 = vmatprep.subr.mxu0 0.0
  %709 = vmatpush1.msra.mxu0 0.0
  %710 = vmatprep.subr.mxu0 0.0
  %711 = vmatpush1.msra.mxu0 0.0
  %712 = vmatprep.subr.mxu0 0.0
  %713 = vmatpush1.msra.mxu0 0.0
  %714 = vmatprep.subr.mxu0 0.0
  %715 = vmatpush1.msra.mxu0 0.0
  %716 = vmatprep.subr.mxu0 0.0
  %717 = vmatpush1.msra.mxu0 0.0
  %718 = vmatprep.subr.mxu0 0.0
  %719 = vmatpush1.msra.mxu0 0.0
  %720 = vmatprep.subr.mxu0 0.0
  %721 = vmatpush1.msra.mxu0 0.0
  %722 = vmatprep.subr.mxu0 0.0
  %723 = vmatpush1.msra.mxu0 0.0
  %724 = vmatprep.subr.mxu0 0.0
  %725 = vmatpush1.msra.mxu0 0.0
  %726 = vmatprep.subr.mxu0 0.0
  %727 = vmatpush1.msra.mxu0 0.0
  %728 = vmatprep.subr.mxu0 0.0
  %729 = vmatpush1.msra.mxu0 0.0
  %730 = vmatprep.subr.mxu0 0.0
  %731 = vmatpush1.msra.mxu0 0.0
  %732 = vmatprep.subr.mxu0 0.0
  %733 = vmatpush1.msra.mxu0 0.0
  %734 = vmatprep.subr.mxu0 0.0
  %735 = vmatpush1.msra.mxu0 0.0
  %736 = vmatprep.subr.mxu0 0.0
  %737 = vmatpush1.msra.mxu0 0.0
  %738 = vmatprep.mubr.f32.mxu0 0.0
  %739 = vmatmul.mubr.f32.gmra.mrb[0].mxu0 %v601
  %v740 = vpop.f32.mrb[0].mxu0
  %v741 = vadd.f32 0.0, %v740
  %v742 = vpop.f32.mrb[0].mxu0
  %743 = vdwg.mxu0
  %v744 = vmul.f32 %v741, %v599
  %745 = vmatprep.subr.mxu0 0.0
  %746 = vmatpush1.msra.mxu0 %v265
  %747 = vmatprep.subr.mxu0 0.0
  %748 = vmatpush1.msra.mxu0 0.0
  %749 = vmatprep.subr.mxu0 0.0
  %750 = vmatpush1.msra.mxu0 0.0
  %751 = vmatprep.subr.mxu0 0.0
  %752 = vmatpush1.msra.mxu0 0.0
  %753 = vmatprep.subr.mxu0 0.0
  %754 = vmatpush1.msra.mxu0 0.0
  %755 = vmatprep.subr.mxu0 0.0
  %756 = vmatpush1.msra.mxu0 0.0
  %757 = vmatprep.subr.mxu0 0.0
  %758 = vmatpush1.msra.mxu0 0.0
  %759 = vmatprep.subr.mxu0 0.0
  %760 = vmatpush1.msra.mxu0 0.0
  %761 = vmatprep.subr.mxu0 0.0
  %762 = vmatpush1.msra.mxu0 0.0
  %763 = vmatprep.subr.mxu0 0.0
  %764 = vmatpush1.msra.mxu0 0.0
  %765 = vmatprep.subr.mxu0 0.0
  %766 = vmatpush1.msra.mxu0 0.0
  %767 = vmatprep.subr.mxu0 0.0
  %768 = vmatpush1.msra.mxu0 0.0
  %769 = vmatprep.subr.mxu0 0.0
  %770 = vmatpush1.msra.mxu0 0.0
  %771 = vmatprep.subr.mxu0 0.0
  %772 = vmatpush1.msra.mxu0 0.0
  %773 = vmatprep.subr.mxu0 0.0
  %774 = vmatpush1.msra.mxu0 0.0
  %775 = vmatprep.subr.mxu0 0.0
  %776 = vmatpush1.msra.mxu0 0.0
  %777 = vmatprep.subr.mxu0 0.0
  %778 = vmatpush1.msra.mxu0 0.0
  %779 = vmatprep.subr.mxu0 0.0
  %780 = vmatpush1.msra.mxu0 0.0
  %781 = vmatprep.subr.mxu0 0.0
  %782 = vmatpush1.msra.mxu0 0.0
  %783 = vmatprep.subr.mxu0 0.0
  %784 = vmatpush1.msra.mxu0 0.0
  %785 = vmatprep.subr.mxu0 0.0
  %786 = vmatpush1.msra.mxu0 0.0
  %787 = vmatprep.subr.mxu0 0.0
  %788 = vmatpush1.msra.mxu0 0.0
  %789 = vmatprep.subr.mxu0 0.0
  %790 = vmatpush1.msra.mxu0 0.0
  %791 = vmatprep.subr.mxu0 0.0
  %792 = vmatpush1.msra.mxu0 0.0
  %793 = vmatprep.subr.mxu0 0.0
  %794 = vmatpush1.msra.mxu0 0.0
  %795 = vmatprep.subr.mxu0 0.0
  %796 = vmatpush1.msra.mxu0 0.0
  %797 = vmatprep.subr.mxu0 0.0
  %798 = vmatpush1.msra.mxu0 0.0
  %799 = vmatprep.subr.mxu0 0.0
  %800 = vmatpush1.msra.mxu0 0.0
  %801 = vmatprep.subr.mxu0 0.0
  %802 = vmatpush1.msra.mxu0 0.0
  %803 = vmatprep.subr.mxu0 0.0
  %804 = vmatpush1.msra.mxu0 0.0
  %805 = vmatprep.subr.mxu0 0.0
  %806 = vmatpush1.msra.mxu0 0.0
  %807 = vmatprep.subr.mxu0 0.0
  %808 = vmatpush1.msra.mxu0 0.0
  %809 = vmatprep.mubr.f32.mxu0 0.0
  %810 = vmatmul.mubr.f32.gmra.mrb[0].mxu0 %v601
  %v811 = vpop.f32.mrb[0].mxu0
  %v812 = vadd.f32 0.0, %v811
  %v813 = vpop.f32.mrb[0].mxu0
  %814 = vdwg.mxu0
  %v815 = vmul.f32 %v812, %v599
  %v817 = vsel %vm50, %v46, 0
  %819 = vmatprep.subr.mxu0 0.0
  %820 = vmatpush1.msra.mxu0 %v673
  %821 = vmatprep.subr.mxu0 0.0
  %822 = vmatpush1.msra.mxu0 0.0
  %823 = vmatprep.subr.mxu0 0.0
  %824 = vmatpush1.msra.mxu0 0.0
  %825 = vmatprep.subr.mxu0 0.0
  %826 = vmatpush1.msra.mxu0 0.0
  %827 = vmatprep.subr.mxu0 0.0
  %828 = vmatpush1.msra.mxu0 0.0
  %829 = vmatprep.subr.mxu0 0.0
  %830 = vmatpush1.msra.mxu0 0.0
  %831 = vmatprep.subr.mxu0 0.0
  %832 = vmatpush1.msra.mxu0 0.0
  %833 = vmatprep.subr.mxu0 0.0
  %834 = vmatpush1.msra.mxu0 0.0
  %835 = vmatprep.subr.mxu0 0.0
  %836 = vmatpush1.msra.mxu0 0.0
  %837 = vmatprep.subr.mxu0 0.0
  %838 = vmatpush1.msra.mxu0 0.0
  %839 = vmatprep.subr.mxu0 0.0
  %840 = vmatpush1.msra.mxu0 0.0
  %841 = vmatprep.subr.mxu0 0.0
  %842 = vmatpush1.msra.mxu0 0.0
  %843 = vmatprep.subr.mxu0 0.0
  %844 = vmatpush1.msra.mxu0 0.0
  %845 = vmatprep.subr.mxu0 0.0
  %846 = vmatpush1.msra.mxu0 0.0
  %847 = vmatprep.subr.mxu0 0.0
  %848 = vmatpush1.msra.mxu0 0.0
  %849 = vmatprep.subr.mxu0 0.0
  %850 = vmatpush1.msra.mxu0 0.0
  %851 = vmatprep.subr.mxu0 0.0
  %852 = vmatpush1.msra.mxu0 0.0
  %853 = vmatprep.subr.mxu0 0.0
  %854 = vmatpush1.msra.mxu0 0.0
  %855 = vmatprep.subr.mxu0 0.0
  %856 = vmatpush1.msra.mxu0 0.0
  %857 = vmatprep.subr.mxu0 0.0
  %858 = vmatpush1.msra.mxu0 0.0
  %859 = vmatprep.subr.mxu0 0.0
  %860 = vmatpush1.msra.mxu0 0.0
  %861 = vmatprep.subr.mxu0 0.0
  %862 = vmatpush1.msra.mxu0 0.0
  %863 = vmatprep.subr.mxu0 0.0
  %864 = vmatpush1.msra.mxu0 0.0
  %865 = vmatprep.subr.mxu0 0.0
  %866 = vmatpush1.msra.mxu0 0.0
  %867 = vmatprep.subr.mxu0 0.0
  %868 = vmatpush1.msra.mxu0 0.0
  %869 = vmatprep.subr.mxu0 0.0
  %870 = vmatpush1.msra.mxu0 0.0
  %871 = vmatprep.subr.mxu0 0.0
  %872 = vmatpush1.msra.mxu0 0.0
  %873 = vmatprep.subr.mxu0 0.0
  %874 = vmatpush1.msra.mxu0 0.0
  %875 = vmatprep.subr.mxu0 0.0
  %876 = vmatpush1.msra.mxu0 0.0
  %877 = vmatprep.subr.mxu0 0.0
  %878 = vmatpush1.msra.mxu0 0.0
  %879 = vmatprep.subr.mxu0 0.0
  %880 = vmatpush1.msra.mxu0 0.0
  %881 = vmatprep.subr.mxu0 0.0
  %882 = vmatpush1.msra.mxu0 0.0
  %883 = vmatprep.mubr.f32.mxu0 0.0
  %884 = vmatmul.mubr.f32.gmra.mrb[0].mxu0 %v817
  %v885 = vpop.f32.mrb[0].mxu0
  %v886 = vadd.f32 0.0, %v885
  %v887 = vpop.f32.mrb[0].mxu0
  %888 = vdwg.mxu0
  %889 = vmatprep.subr.mxu0 0.0
  %890 = vmatpush1.msra.mxu0 %v744
  %891 = vmatprep.subr.mxu0 0.0
  %892 = vmatpush1.msra.mxu0 0.0
  %893 = vmatprep.subr.mxu0 0.0
  %894 = vmatpush1.msra.mxu0 0.0
  %895 = vmatprep.subr.mxu0 0.0
  %896 = vmatpush1.msra.mxu0 0.0
  %897 = vmatprep.subr.mxu0 0.0
  %898 = vmatpush1.msra.mxu0 0.0
  %899 = vmatprep.subr.mxu0 0.0
  %900 = vmatpush1.msra.mxu0 0.0
  %901 = vmatprep.subr.mxu0 0.0
  %902 = vmatpush1.msra.mxu0 0.0
  %903 = vmatprep.subr.mxu0 0.0
  %904 = vmatpush1.msra.mxu0 0.0
  %905 = vmatprep.subr.mxu0 0.0
  %906 = vmatpush1.msra.mxu0 0.0
  %907 = vmatprep.subr.mxu0 0.0
  %908 = vmatpush1.msra.mxu0 0.0
  %909 = vmatprep.subr.mxu0 0.0
  %910 = vmatpush1.msra.mxu0 0.0
  %911 = vmatprep.subr.mxu0 0.0
  %912 = vmatpush1.msra.mxu0 0.0
  %913 = vmatprep.subr.mxu0 0.0
  %914 = vmatpush1.msra.mxu0 0.0
  %915 = vmatprep.subr.mxu0 0.0
  %916 = vmatpush1.msra.mxu0 0.0
  %917 = vmatprep.subr.mxu0 0.0
  %918 = vmatpush1.msra.mxu0 0.0
  %919 = vmatprep.subr.mxu0 0.0
  %920 = vmatpush1.msra.mxu0 0.0
  %921 = vmatprep.subr.mxu0 0.0
  %922 = vmatpush1.msra.mxu0 0.0
  %923 = vmatprep.subr.mxu0 0.0
  %924 = vmatpush1.msra.mxu0 0.0
  %925 = vmatprep.subr.mxu0 0.0
  %926 = vmatpush1.msra.mxu0 0.0
  %927 = vmatprep.subr.mxu0 0.0
  %928 = vmatpush1.msra.mxu0 0.0
  %929 = vmatprep.subr.mxu0 0.0
  %930 = vmatpush1.msra.mxu0 0.0
  %931 = vmatprep.subr.mxu0 0.0
  %932 = vmatpush1.msra.mxu0 0.0
  %933 = vmatprep.subr.mxu0 0.0
  %934 = vmatpush1.msra.mxu0 0.0
  %935 = vmatprep.subr.mxu0 0.0
  %936 = vmatpush1.msra.mxu0 0.0
  %937 = vmatprep.subr.mxu0 0.0
  %938 = vmatpush1.msra.mxu0 0.0
  %939 = vmatprep.subr.mxu0 0.0
  %940 = vmatpush1.msra.mxu0 0.0
  %941 = vmatprep.subr.mxu0 0.0
  %942 = vmatpush1.msra.mxu0 0.0
  %943 = vmatprep.subr.mxu0 0.0
  %944 = vmatpush1.msra.mxu0 0.0
  %945 = vmatprep.subr.mxu0 0.0
  %946 = vmatpush1.msra.mxu0 0.0
  %947 = vmatprep.subr.mxu0 0.0
  %948 = vmatpush1.msra.mxu0 0.0
  %949 = vmatprep.subr.mxu0 0.0
  %950 = vmatpush1.msra.mxu0 0.0
  %951 = vmatprep.subr.mxu0 0.0
  %952 = vmatpush1.msra.mxu0 0.0
  %953 = vmatprep.mubr.f32.mxu0 0.0
  %954 = vmatmul.mubr.f32.gmra.mrb[0].mxu0 %v817
  %v955 = vpop.f32.mrb[0].mxu0
  %v956 = vadd.f32 0.0, %v955
  %v957 = vpop.f32.mrb[0].mxu0
  %958 = vdwg.mxu0
  %959 = vmatprep.subr.mxu0 0.0
  %960 = vmatpush1.msra.mxu0 %v815
  %961 = vmatprep.subr.mxu0 0.0
  %962 = vmatpush1.msra.mxu0 0.0
  %963 = vmatprep.subr.mxu0 0.0
  %964 = vmatpush1.msra.mxu0 0.0
  %965 = vmatprep.subr.mxu0 0.0
  %966 = vmatpush1.msra.mxu0 0.0
  %967 = vmatprep.subr.mxu0 0.0
  %968 = vmatpush1.msra.mxu0 0.0
  %969 = vmatprep.subr.mxu0 0.0
  %970 = vmatpush1.msra.mxu0 0.0
  %971 = vmatprep.subr.mxu0 0.0
  %972 = vmatpush1.msra.mxu0 0.0
  %973 = vmatprep.subr.mxu0 0.0
  %974 = vmatpush1.msra.mxu0 0.0
  %975 = vmatprep.subr.mxu0 0.0
  %976 = vmatpush1.msra.mxu0 0.0
  %977 = vmatprep.subr.mxu0 0.0
  %978 = vmatpush1.msra.mxu0 0.0
  %979 = vmatprep.subr.mxu0 0.0
  %980 = vmatpush1.msra.mxu0 0.0
  %981 = vmatprep.subr.mxu0 0.0
  %982 = vmatpush1.msra.mxu0 0.0
  %983 = vmatprep.subr.mxu0 0.0
  %984 = vmatpush1.msra.mxu0 0.0
  %985 = vmatprep.subr.mxu0 0.0
  %986 = vmatpush1.msra.mxu0 0.0
  %987 = vmatprep.subr.mxu0 0.0
  %988 = vmatpush1.msra.mxu0 0.0
  %989 = vmatprep.subr.mxu0 0.0
  %990 = vmatpush1.msra.mxu0 0.0
  %991 = vmatprep.subr.mxu0 0.0
  %992 = vmatpush1.msra.mxu0 0.0
  %993 = vmatprep.subr.mxu0 0.0
  %994 = vmatpush1.msra.mxu0 0.0
  %995 = vmatprep.subr.mxu0 0.0
  %996 = vmatpush1.msra.mxu0 0.0
  %997 = vmatprep.subr.mxu0 0.0
  %998 = vmatpush1.msra.mxu0 0.0
  %999 = vmatprep.subr.mxu0 0.0
  %1000 = vmatpush1.msra.mxu0 0.0
  %1001 = vmatprep.subr.mxu0 0.0
  %1002 = vmatpush1.msra.mxu0 0.0
  %1003 = vmatprep.subr.mxu0 0.0
  %1004 = vmatpush1.msra.mxu0 0.0
  %1005 = vmatprep.subr.mxu0 0.0
  %1006 = vmatpush1.msra.mxu0 0.0
  %1007 = vmatprep.subr.mxu0 0.0
  %1008 = vmatpush1.msra.mxu0 0.0
  %1009 = vmatprep.subr.mxu0 0.0
  %1010 = vmatpush1.msra.mxu0 0.0
  %1011 = vmatprep.subr.mxu0 0.0
  %1012 = vmatpush1.msra.mxu0 0.0
  %1013 = vmatprep.subr.mxu0 0.0
  %1014 = vmatpush1.msra.mxu0 0.0
  %1015 = vmatprep.subr.mxu0 0.0
  %1016 = vmatpush1.msra.mxu0 0.0
  %1017 = vmatprep.subr.mxu0 0.0
  %1018 = vmatpush1.msra.mxu0 0.0
  %1019 = vmatprep.subr.mxu0 0.0
  %1020 = vmatpush1.msra.mxu0 0.0
  %1021 = vmatprep.subr.mxu0 0.0
  %1022 = vmatpush1.msra.mxu0 0.0
  %1023 = vmatprep.mubr.f32.mxu0 0.0
  %1024 = vmatmul.mubr.f32.gmra.mrb[0].mxu0 %v817
  %v1025 = vpop.f32.mrb[0].mxu0
  %v1026 = vadd.f32 0.0, %v1025
  %v1027 = vpop.f32.mrb[0].mxu0
  %1028 = vdwg.mxu0
  %v1029 = vmul.f32 %v673, %v886
  %v1030 = vmul.f32 %v744, %v956
  %v1031 = vadd.f32 %v1029, %v1030
  %v1032 = vmul.f32 %v815, %v1026
  %v1033 = vadd.f32 %v1031, %v1032
  %v1034 = vmul.f32 %v886, %v886
  %v1035 = vmul.f32 %v956, %v956
  %v1036 = vadd.f32 %v1034, %v1035
  %v1037 = vmul.f32 %v1026, %v1026
  %v1038 = vadd.f32 %v1036, %v1037
  %vm1039 = vcmp.ge.f32.partialorder %v1033, 0.0
  %v1040 = vmul.f32 %v1033, 0.99
  %v1041 = vadd.f32 %v1038, 1e-06
  %v1042 = vrcp.pop %v1041
  %v1043 = vmul.f32 %v1040, %v1042
  %v1044 = vsel %vm1039, 0.0, %v1043
  %v1045 = vmul.f32 %v1044, %v886
  %v1046 = vsub.f32 %v673, %v1045
  %1047 = vst [vmem:[%s11] sm:$0xff] %v1046
  %v1048 = vmul.f32 %v1044, %v956
  %v1049 = vsub.f32 %v744, %v1048
  %s1050 = scalar_lea.vmem %s11, 8
  %1051 = vst [vmem:[%s1050] sm:$0xff] %v1049
  %v1052 = vmul.f32 %v1044, %v1026
  %v1053 = vsub.f32 %v815, %v1052
  %s1054 = scalar_lea.vmem %s11, 16
  %1055 = vst [vmem:[%s1054] sm:$0xff] %v1053
  %vm1056 = vcmp.ge.f32.partialorder %v508, 0.0
  %vm1057 = vcmp.ge.f32.partialorder %v513, 0.0
  %v1058 = vmul.f32 %v508, 0.01
  %v1059 = vmul.f32 %v513, 0.01
  %v1060 = vsel %vm1056, %v508, %v1058
  %v1061 = vsel %vm1057, %v513, %v1059
  %1062 = vst [vmem:[%s10] sm:$0xff] %v1060
  %1063 = vst [vmem:[%s10 + $0x8] sm:$0xff] %v1061
  // Predicated region
  $region42: #{gb_perceptron_vn.1} parent=0 // pred_check
    _
  $region43: #{gb_perceptron_vn.1} parent=0 // pred_check_branch
    %1065 = sbr.rel (0) target = $region45
  $region44: #{gb_perceptron_vn.1} parent=0 // pred_region
    _
  $region45: #{gb_perceptron_vn.1} parent=0 // pred_fallthru
    _
  // Predicated region
  $region46: #{gb_perceptron_vn.1} parent=0 // pred_check
    _
  $region47: #{gb_perceptron_vn.1} parent=0 // pred_check_branch
    %1067 = sbr.rel (0) target = $region49
  $region48: #{gb_perceptron_vn.1} parent=0 // pred_region
    _
  $region49: #{gb_perceptron_vn.1} parent=0 // pred_fallthru
    _
  // Predicated region
  $region50: #{gb_perceptron_vn.1} parent=0 // pred_check
    _
  $region51: #{gb_perceptron_vn.1} parent=0 // pred_check_branch
    %1069 = sbr.rel (0) target = $region53
  $region52: #{gb_perceptron_vn.1} parent=0 // pred_region
    _
  $region53: #{gb_perceptron_vn.1} parent=0 // pred_fallthru
    _
  // Predicated region
  $region54: #{gb_perceptron_vn.1} parent=0 // pred_check
    _
  $region55: #{gb_perceptron_vn.1} parent=0 // pred_check_branch
    %1071 = sbr.rel (0) target = $region57
  $region56: #{gb_perceptron_vn.1} parent=0 // pred_region
    _
  $region57: #{gb_perceptron_vn.1} parent=0 // pred_fallthru
    _

</llo_original>
